<compile_context>
chip_gen: v5e
topology: v5e:2x2
jax: 0.10.0
libtpu: 0.0.40
codegen_flags: <defaults>
</compile_context>

<pallas_src>
import jax
import jax.numpy as jnp
from jax.experimental import pallas as pl
from jax.experimental.pallas import tpu as pltpu


# ----------------------------- Pallas kernel ------------------------------ #

def _make_sstcn_kernel(num_layers, seq_len, b_tile):
    dilations = [2 ** i for i in range(num_layers)]
    rows = b_tile * seq_len
    bf16, f32 = jnp.bfloat16, jnp.float32

    def kernel(x_ref, t_ref, w_in_ref, b_in_ref, *args):
        # args layout:
        #   [wd0_0, wd1_0, wd2_0, bd_0, w1_0, b1_0, ... per layer ...,
        #    w_out_t, b_out_t, o_ref]
        layer_refs = args[: 6 * num_layers]
        w_out_t_ref, b_out_t_ref, o_ref = args[6 * num_layers:]

        # SingleStageModel.conv_1x1 : dim -> hidden (bf16 MXU, f32 accumulate)
        h = jnp.dot(x_ref[...], w_in_ref[...], preferred_element_type=f32)
        h = h + b_in_ref[...]                                    # (rows, H) f32
        H = h.shape[1]

        # Per-row within-batch time index, hoisted out of the layer loop
        # (no per-layer iota/broadcast re-emission).
        t_idx = jnp.broadcast_to(t_ref[...], (rows, H))          # int32

        for li, d in enumerate(dilations):
            wd0 = layer_refs[6 * li][...]      # (H, H) bf16, tap on h[t-d]
            wd1 = layer_refs[6 * li + 1][...]  # (H, H) bf16, tap on h[t]
            wd2 = layer_refs[6 * li + 2][...]  # (H, H) bf16, tap on h[t+d]
            bd = layer_refs[6 * li + 3][...]   # (1, H)  f32
            w1 = layer_refs[6 * li + 4][...]   # (H, H)  bf16
            b1 = layer_refs[6 * li + 5][...]   # (1, H)  f32

            # Zero-padded temporal shifts (same-length dilated conv, padding=d).
            # Rolls are over the folded (batch*time) sublane axis; the masks on
            # the within-batch time index stop cross-batch leakage.
            h_prev = jnp.where(t_idx >= d,
                               pltpu.roll(h, d % rows, axis=0), 0.0)           # h[t-d]
            h_next = jnp.where(t_idx < seq_len - d,
                               pltpu.roll(h, (rows - d) % rows, axis=0), 0.0)  # h[t+d]

            # conv_dilated (k=3): one MXU matmul per tap, f32 accumulation,
            # then bias + ReLU (VPU, f32).
            hb = h.astype(bf16)
            y = (jnp.dot(h_prev.astype(bf16), wd0, preferred_element_type=f32)
                 + jnp.dot(hb, wd1, preferred_element_type=f32)
                 + jnp.dot(h_next.astype(bf16), wd2, preferred_element_type=f32)
                 + bd)
            y = jnp.maximum(y, 0.0)                              # ReLU
            # conv_1x1
            y = jnp.dot(y.astype(bf16), w1, preferred_element_type=f32) + b1
            # nn.Dropout is identity at inference time
            h = h + y                                            # residual

        # conv_out : hidden -> num_classes, emitted directly as (C, T) per
        # batch (PyTorch Conv1d layout), no wrapper-side transpose needed.
        h_bf = h.astype(bf16)
        w_out_t = w_out_t_ref[...]                               # (C, H) bf16
        b_out_t = b_out_t_ref[...]                               # (C, 1) f32
        for b in range(b_tile):
            h_b = h_bf[b * seq_len:(b + 1) * seq_len, :]         # (T, H), sublane-aligned slice
            logits_t = jnp.dot(w_out_t, h_b.T,
                               preferred_element_type=f32) + b_out_t  # (C, T)
            o_ref[b, :, :] = logits_t.astype(o_ref.dtype)

    return kernel


# ------------------------------- wrapper ----------------------------------- #

@jax.jit
def sstcn_forward(rgb, flow, params):
    """rgb, flow: (B, T, input_size). Returns (B, num_classes, T) float32."""
    # 'both' feature mode: cat along the feature dim (PyTorch dim=2)
    x = jnp.concatenate([rgb, flow], axis=2)                     # (B, T, D)
    B, T, D = x.shape
    num_layers = len(params['layers'])
    H = params['w_in'].shape[1]
    C = params['w_out'].shape[1]
    bf16, f32 = jnp.bfloat16, jnp.float32

    # Fold batch into the matmul M dimension; keep at most a 2-way "parallel"
    # grid so both v7x TensorCores get work (costs nothing on v5e/v6e).
    n_tiles = 2 if (B >= 2 and B % 2 == 0 and ((B // 2) * T) % 8 == 0) else 1
    b_tile = B // n_tiles
    bt_tile = b_tile * T

    x2 = x.reshape(B * T, D).astype(bf16)                        # (B*T, D)
    # per-row within-batch time index for the dilation boundary masks
    t_idx = jnp.broadcast_to(jnp.arange(T, dtype=jnp.int32)[None, :],
                             (B, T)).reshape(B * T, 1)

    # Weights: bf16 MXU operands, f32 biases.  Each dilated-conv tap is
    # passed as its own (H, H) matrix (no lane concat in-kernel).
    weight_args = [params['w_in'].astype(bf16), params['b_in'].astype(f32)]
    weight_specs = [
        pl.BlockSpec((D, H), lambda i: (0, 0)),
        pl.BlockSpec((1, H), lambda i: (0, 0)),
    ]
    for (wd, bd, w1, b1) in params['layers']:
        weight_args += [wd[0].astype(bf16), wd[1].astype(bf16),
                        wd[2].astype(bf16), bd.astype(f32),
                        w1.astype(bf16), b1.astype(f32)]
        weight_specs += [
            pl.BlockSpec((H, H), lambda i: (0, 0)),
            pl.BlockSpec((H, H), lambda i: (0, 0)),
            pl.BlockSpec((H, H), lambda i: (0, 0)),
            pl.BlockSpec((1, H), lambda i: (0, 0)),
            pl.BlockSpec((H, H), lambda i: (0, 0)),
            pl.BlockSpec((1, H), lambda i: (0, 0)),
        ]
    # conv_out weights pre-transposed so the kernel emits (C, T) directly
    weight_args += [params['w_out'].T.astype(bf16),
                    params['b_out'].reshape(C, 1).astype(f32)]
    weight_specs += [
        pl.BlockSpec((C, H), lambda i: (0, 0)),
        pl.BlockSpec((C, 1), lambda i: (0, 0)),
    ]

    # Explicit VMEM budget.  BlockSpec operands are double-buffered; add room
    # for in-kernel activation temporaries plus compiler scratch.
    weight_bytes = sum(int(w.size) * w.dtype.itemsize for w in weight_args)
    io_bytes = bt_tile * D * 2 + bt_tile * 4 + b_tile * C * T * 4
    act_bytes = bt_tile * H * 4 * 12
    vmem_limit = int(min(2 * (weight_bytes + io_bytes) + act_bytes + (8 << 20),
                         56 << 20))
    # TODO(synk): for large H / num_layers, single-buffer the constant-index
    # weight BlockSpecs (or DMA them once into scratch) to halve weight VMEM.
    # TODO(synk): for long sequences, tile T with 2**(num_layers-1) halos
    # instead of keeping the whole (T, H) slab resident.

    kernel = _make_sstcn_kernel(num_layers, T, b_tile)
    out = pl.pallas_call(
        kernel,
        out_shape=jax.ShapeDtypeStruct((B, C, T), jnp.float32),
        grid=(n_tiles,),
        in_specs=[pl.BlockSpec((bt_tile, D), lambda i: (i, 0)),
                  pl.BlockSpec((bt_tile, 1), lambda i: (i, 0))] + weight_specs,
        out_specs=pl.BlockSpec((b_tile, C, T), lambda i: (i, 0, 0)),
        compiler_params=pltpu.CompilerParams(
            dimension_semantics=("parallel",),
            vmem_limit_bytes=vmem_limit),
    )(x2, t_idx, *weight_args)

    # already in the PyTorch Conv1d output convention: (B, num_classes, T)
    return out


# --------------------------- params / reference ---------------------------- #

def init_params(key, input_dim, hidden, num_layers, num_classes):
    def nrm(k, shape, scale=0.1):
        return scale * jax.random.normal(k, shape, dtype=jnp.float32)

    keys = jax.random.split(key, 4 + 4 * num_layers)
    params = {
        'w_in': nrm(keys[0], (input_dim, hidden)),
        'b_in': nrm(keys[1], (1, hidden)),
        'w_out': nrm(keys[2], (hidden, num_classes)),
        'b_out': nrm(keys[3], (1, num_classes)),
        'layers': [],
    }
    for li in range(num_layers):
        k0, k1, k2, k3 = jax.random.split(keys[4 + li], 4)
        params['layers'].append((
            nrm(k0, (3, hidden, hidden)),   # dilated conv taps, (k, in, out)
            nrm(k1, (1, hidden)),
            nrm(k2, (hidden, hidden)),      # 1x1 conv, (in, out)
            nrm(k3, (1, hidden)),
        ))
    return params


def sstcn_reference(rgb, flow, params):
    """Pure-JAX f32 reference reproducing the PyTorch forward (eval mode)."""
    x = jnp.concatenate([rgb, flow], axis=2)                     # (B, T, D)
    h = jnp.einsum('btd,dh->bth', x, params['w_in']) + params['b_in']
    num_layers = len(params['layers'])
    for (wd, bd, w1, b1), d in zip(params['layers'],
                                   [2 ** i for i in range(num_layers)]):
        B, T, H = h.shape
        zeros = jnp.zeros((B, d, H), h.dtype)
        h_prev = jnp.concatenate([zeros, h[:, : T - d]], axis=1)
        h_next = jnp.concatenate([h[:, d:], zeros], axis=1)
        y = (jnp.einsum('bth,ho->bto', h_prev, wd[0])
             + jnp.einsum('bth,ho->bto', h, wd[1])
             + jnp.einsum('bth,ho->bto', h_next, wd[2]) + bd)
        y = jnp.maximum(y, 0.0)
        y = jnp.einsum('bth,ho->bto', y, w1) + b1
        h = h + y
    out = jnp.einsum('bth,hc->btc', h, params['w_out']) + params['b_out']
    return jnp.transpose(out, (0, 2, 1))


# --------------------------------- main ------------------------------------ #

if __name__ == "__main__":
    # p = {'hidden_size': 32, 'num_layers': 2, 'len_sequence': 16,
    #      'feature': 'i3d_both', 'input_size': 8, 'use_dropout': 0.5}
    B, T, F_IN = 2, 16, 8
    HIDDEN, NUM_LAYERS, NUM_CLASSES = 32, 2, 3
    D = 2 * F_IN  # rgb + flow concatenated

    key = jax.random.PRNGKey(0)
    k_rgb, k_flow, k_params = jax.random.split(key, 3)
    rgb = jax.random.normal(k_rgb, (B, T, F_IN), dtype=jnp.float32)
    flow = jax.random.normal(k_flow, (B, T, F_IN), dtype=jnp.float32)
    params = init_params(k_params, D, HIDDEN, NUM_LAYERS, NUM_CLASSES)

    logits = sstcn_forward(rgb, flow, params)
    logits = jax.block_until_ready(logits)

    ref = jax.block_until_ready(sstcn_reference(rgb, flow, params))
    assert logits.shape == (B, NUM_CLASSES, T), logits.shape
    # bf16 MXU operands (f32 accumulation) -> slightly looser tolerance vs
    # the pure-f32 reference.
    assert jnp.allclose(logits, ref, rtol=5e-2, atol=5e-2), \
        float(jnp.max(jnp.abs(logits - ref)))

    print("KERNEL_OK")
</pallas_src>

<mosaic_0001>
module attributes {stable_mosaic.version = 11 : i64} {
  func.func @kernel(%arg0: i32, %arg1: memref<16x16xbf16, #tpu.memory_space<vmem>>, %arg2: memref<16x1xi32, #tpu.memory_space<vmem>>, %arg3: memref<16x32xbf16, #tpu.memory_space<vmem>>, %arg4: memref<1x32xf32, #tpu.memory_space<vmem>>, %arg5: memref<32x32xbf16, #tpu.memory_space<vmem>>, %arg6: memref<32x32xbf16, #tpu.memory_space<vmem>>, %arg7: memref<32x32xbf16, #tpu.memory_space<vmem>>, %arg8: memref<1x32xf32, #tpu.memory_space<vmem>>, %arg9: memref<32x32xbf16, #tpu.memory_space<vmem>>, %arg10: memref<1x32xf32, #tpu.memory_space<vmem>>, %arg11: memref<32x32xbf16, #tpu.memory_space<vmem>>, %arg12: memref<32x32xbf16, #tpu.memory_space<vmem>>, %arg13: memref<32x32xbf16, #tpu.memory_space<vmem>>, %arg14: memref<1x32xf32, #tpu.memory_space<vmem>>, %arg15: memref<32x32xbf16, #tpu.memory_space<vmem>>, %arg16: memref<1x32xf32, #tpu.memory_space<vmem>>, %arg17: memref<3x32xbf16, #tpu.memory_space<vmem>>, %arg18: memref<3x1xf32, #tpu.memory_space<vmem>>, %arg19: memref<1x3x16xf32, #tpu.memory_space<vmem>>) attributes {dimension_semantics = [#tpu.dimension_semantics<parallel>], iteration_bounds = array<i64: 2>, scalar_prefetch = 0 : i64, scratch_operands = 0 : i64, tpu.core_type = #tpu.core_type<tc>, window_params = [{transform_indices = @transform_0, window_bounds = array<i64: 16, 16>}, {transform_indices = @transform_1, window_bounds = array<i64: 16, 1>}, {pipeline_mode = #tpu.pipeline_mode<synchronous>, transform_indices = @transform_2, window_bounds = array<i64: 16, 32>}, {pipeline_mode = #tpu.pipeline_mode<synchronous>, transform_indices = @transform_3, window_bounds = array<i64: 1, 32>}, {pipeline_mode = #tpu.pipeline_mode<synchronous>, transform_indices = @transform_4, window_bounds = array<i64: 32, 32>}, {pipeline_mode = #tpu.pipeline_mode<synchronous>, transform_indices = @transform_5, window_bounds = array<i64: 32, 32>}, {pipeline_mode = #tpu.pipeline_mode<synchronous>, transform_indices = @transform_6, window_bounds = array<i64: 32, 32>}, {pipeline_mode = #tpu.pipeline_mode<synchronous>, transform_indices = @transform_7, window_bounds = array<i64: 1, 32>}, {pipeline_mode = #tpu.pipeline_mode<synchronous>, transform_indices = @transform_8, window_bounds = array<i64: 32, 32>}, {pipeline_mode = #tpu.pipeline_mode<synchronous>, transform_indices = @transform_9, window_bounds = array<i64: 1, 32>}, {pipeline_mode = #tpu.pipeline_mode<synchronous>, transform_indices = @transform_10, window_bounds = array<i64: 32, 32>}, {pipeline_mode = #tpu.pipeline_mode<synchronous>, transform_indices = @transform_11, window_bounds = array<i64: 32, 32>}, {pipeline_mode = #tpu.pipeline_mode<synchronous>, transform_indices = @transform_12, window_bounds = array<i64: 32, 32>}, {pipeline_mode = #tpu.pipeline_mode<synchronous>, transform_indices = @transform_13, window_bounds = array<i64: 1, 32>}, {pipeline_mode = #tpu.pipeline_mode<synchronous>, transform_indices = @transform_14, window_bounds = array<i64: 32, 32>}, {pipeline_mode = #tpu.pipeline_mode<synchronous>, transform_indices = @transform_15, window_bounds = array<i64: 1, 32>}, {pipeline_mode = #tpu.pipeline_mode<synchronous>, transform_indices = @transform_16, window_bounds = array<i64: 3, 32>}, {pipeline_mode = #tpu.pipeline_mode<synchronous>, transform_indices = @transform_17, window_bounds = array<i64: 3, 1>}, {transform_indices = @transform_18, window_bounds = array<i64: 1, 3, 16>}]} {
    %c0 = arith.constant 0 : index
    %c0_0 = arith.constant 0 : index
    %0 = vector.load %arg1[%c0, %c0_0] : memref<16x16xbf16, #tpu.memory_space<vmem>>, vector<16x16xbf16>
    %c0_1 = arith.constant 0 : index
    %c0_2 = arith.constant 0 : index
    %1 = vector.load %arg3[%c0_1, %c0_2] : memref<16x32xbf16, #tpu.memory_space<vmem>>, vector<16x32xbf16>
    %cst = arith.constant dense<0.000000e+00> : vector<16x32xf32>
    %2 = tpu.matmul %0, %1, %cst {dimension_numbers = #tpu.dot_dimension_numbers<[1], [0], [0], [1], [0, 0, 1, 1], [], []>} : vector<16x16xbf16>, vector<16x32xbf16>, vector<16x32xf32> -> vector<16x32xf32>
    %c0_3 = arith.constant 0 : index
    %c0_4 = arith.constant 0 : index
    %3 = vector.load %arg4[%c0_3, %c0_4] : memref<1x32xf32, #tpu.memory_space<vmem>>, vector<1x32xf32>
    %4 = vector.broadcast %3 : vector<1x32xf32> to vector<16x32xf32>
    %5 = arith.addf %2, %4 : vector<16x32xf32>
    %c0_5 = arith.constant 0 : index
    %c0_6 = arith.constant 0 : index
    %6 = vector.load %arg2[%c0_5, %c0_6] : memref<16x1xi32, #tpu.memory_space<vmem>>, vector<16x1xi32>
    %7 = vector.shape_cast %6 : vector<16x1xi32> to vector<16x1xi32>
    %8 = vector.broadcast %7 : vector<16x1xi32> to vector<16x32xi32>
    %c0_7 = arith.constant 0 : index
    %c0_8 = arith.constant 0 : index
    %9 = vector.load %arg5[%c0_7, %c0_8] : memref<32x32xbf16, #tpu.memory_space<vmem>>, vector<32x32xbf16>
    %c0_9 = arith.constant 0 : index
    %c0_10 = arith.constant 0 : index
    %10 = vector.load %arg6[%c0_9, %c0_10] : memref<32x32xbf16, #tpu.memory_space<vmem>>, vector<32x32xbf16>
    %c0_11 = arith.constant 0 : index
    %c0_12 = arith.constant 0 : index
    %11 = vector.load %arg7[%c0_11, %c0_12] : memref<32x32xbf16, #tpu.memory_space<vmem>>, vector<32x32xbf16>
    %c0_13 = arith.constant 0 : index
    %c0_14 = arith.constant 0 : index
    %12 = vector.load %arg8[%c0_13, %c0_14] : memref<1x32xf32, #tpu.memory_space<vmem>>, vector<1x32xf32>
    %c0_15 = arith.constant 0 : index
    %c0_16 = arith.constant 0 : index
    %13 = vector.load %arg9[%c0_15, %c0_16] : memref<32x32xbf16, #tpu.memory_space<vmem>>, vector<32x32xbf16>
    %c0_17 = arith.constant 0 : index
    %c0_18 = arith.constant 0 : index
    %14 = vector.load %arg10[%c0_17, %c0_18] : memref<1x32xf32, #tpu.memory_space<vmem>>, vector<1x32xf32>
    %c1_i32 = arith.constant 1 : i32
    %15 = vector.broadcast %c1_i32 : i32 to vector<16x32xi32>
    %16 = arith.cmpi sge, %8, %15 : vector<16x32xi32>
    %c1_i32_19 = arith.constant 1 : i32
    %17 = tpu.dynamic_rotate %5 by %c1_i32_19 dim 0 : vector<16x32xf32>, i32 -> vector<16x32xf32>
    %cst_20 = arith.constant 0.000000e+00 : f32
    %18 = vector.broadcast %cst_20 : f32 to vector<16x32xf32>
    %19 = arith.select %16, %17, %18 : vector<16x32xi1>, vector<16x32xf32>
    %c15_i32 = arith.constant 15 : i32
    %20 = vector.broadcast %c15_i32 : i32 to vector<16x32xi32>
    %21 = arith.cmpi slt, %8, %20 : vector<16x32xi32>
    %c15_i32_21 = arith.constant 15 : i32
    %22 = tpu.dynamic_rotate %5 by %c15_i32_21 dim 0 : vector<16x32xf32>, i32 -> vector<16x32xf32>
    %cst_22 = arith.constant 0.000000e+00 : f32
    %23 = vector.broadcast %cst_22 : f32 to vector<16x32xf32>
    %24 = arith.select %21, %22, %23 : vector<16x32xi1>, vector<16x32xf32>
    %25 = arith.truncf %5 : vector<16x32xf32> to vector<16x32xbf16>
    %26 = arith.truncf %19 : vector<16x32xf32> to vector<16x32xbf16>
    %cst_23 = arith.constant dense<0.000000e+00> : vector<16x32xf32>
    %27 = tpu.matmul %26, %9, %cst_23 {dimension_numbers = #tpu.dot_dimension_numbers<[1], [0], [0], [1], [0, 0, 1, 1], [], []>} : vector<16x32xbf16>, vector<32x32xbf16>, vector<16x32xf32> -> vector<16x32xf32>
    %cst_24 = arith.constant dense<0.000000e+00> : vector<16x32xf32>
    %28 = tpu.matmul %25, %10, %cst_24 {dimension_numbers = #tpu.dot_dimension_numbers<[1], [0], [0], [1], [0, 0, 1, 1], [], []>} : vector<16x32xbf16>, vector<32x32xbf16>, vector<16x32xf32> -> vector<16x32xf32>
    %29 = arith.addf %27, %28 : vector<16x32xf32>
    %30 = arith.truncf %24 : vector<16x32xf32> to vector<16x32xbf16>
    %cst_25 = arith.constant dense<0.000000e+00> : vector<16x32xf32>
    %31 = tpu.matmul %30, %11, %cst_25 {dimension_numbers = #tpu.dot_dimension_numbers<[1], [0], [0], [1], [0, 0, 1, 1], [], []>} : vector<16x32xbf16>, vector<32x32xbf16>, vector<16x32xf32> -> vector<16x32xf32>
    %32 = arith.addf %29, %31 : vector<16x32xf32>
    %33 = vector.broadcast %12 : vector<1x32xf32> to vector<16x32xf32>
    %34 = arith.addf %32, %33 : vector<16x32xf32>
    %cst_26 = arith.constant 0.000000e+00 : f32
    %35 = vector.broadcast %cst_26 : f32 to vector<16x32xf32>
    %36 = arith.maximumf %34, %35 : vector<16x32xf32>
    %37 = arith.truncf %36 : vector<16x32xf32> to vector<16x32xbf16>
    %cst_27 = arith.constant dense<0.000000e+00> : vector<16x32xf32>
    %38 = tpu.matmul %37, %13, %cst_27 {dimension_numbers = #tpu.dot_dimension_numbers<[1], [0], [0], [1], [0, 0, 1, 1], [], []>} : vector<16x32xbf16>, vector<32x32xbf16>, vector<16x32xf32> -> vector<16x32xf32>
    %39 = vector.broadcast %14 : vector<1x32xf32> to vector<16x32xf32>
    %40 = arith.addf %38, %39 : vector<16x32xf32>
    %41 = arith.addf %5, %40 : vector<16x32xf32>
    %c0_28 = arith.constant 0 : index
    %c0_29 = arith.constant 0 : index
    %42 = vector.load %arg11[%c0_28, %c0_29] : memref<32x32xbf16, #tpu.memory_space<vmem>>, vector<32x32xbf16>
    %c0_30 = arith.constant 0 : index
    %c0_31 = arith.constant 0 : index
    %43 = vector.load %arg12[%c0_30, %c0_31] : memref<32x32xbf16, #tpu.memory_space<vmem>>, vector<32x32xbf16>
    %c0_32 = arith.constant 0 : index
    %c0_33 = arith.constant 0 : index
    %44 = vector.load %arg13[%c0_32, %c0_33] : memref<32x32xbf16, #tpu.memory_space<vmem>>, vector<32x32xbf16>
    %c0_34 = arith.constant 0 : index
    %c0_35 = arith.constant 0 : index
    %45 = vector.load %arg14[%c0_34, %c0_35] : memref<1x32xf32, #tpu.memory_space<vmem>>, vector<1x32xf32>
    %c0_36 = arith.constant 0 : index
    %c0_37 = arith.constant 0 : index
    %46 = vector.load %arg15[%c0_36, %c0_37] : memref<32x32xbf16, #tpu.memory_space<vmem>>, vector<32x32xbf16>
    %c0_38 = arith.constant 0 : index
    %c0_39 = arith.constant 0 : index
    %47 = vector.load %arg16[%c0_38, %c0_39] : memref<1x32xf32, #tpu.memory_space<vmem>>, vector<1x32xf32>
    %c2_i32 = arith.constant 2 : i32
    %48 = vector.broadcast %c2_i32 : i32 to vector<16x32xi32>
    %49 = arith.cmpi sge, %8, %48 : vector<16x32xi32>
    %c2_i32_40 = arith.constant 2 : i32
    %50 = tpu.dynamic_rotate %41 by %c2_i32_40 dim 0 : vector<16x32xf32>, i32 -> vector<16x32xf32>
    %cst_41 = arith.constant 0.000000e+00 : f32
    %51 = vector.broadcast %cst_41 : f32 to vector<16x32xf32>
    %52 = arith.select %49, %50, %51 : vector<16x32xi1>, vector<16x32xf32>
    %c14_i32 = arith.constant 14 : i32
    %53 = vector.broadcast %c14_i32 : i32 to vector<16x32xi32>
    %54 = arith.cmpi slt, %8, %53 : vector<16x32xi32>
    %c14_i32_42 = arith.constant 14 : i32
    %55 = tpu.dynamic_rotate %41 by %c14_i32_42 dim 0 : vector<16x32xf32>, i32 -> vector<16x32xf32>
    %cst_43 = arith.constant 0.000000e+00 : f32
    %56 = vector.broadcast %cst_43 : f32 to vector<16x32xf32>
    %57 = arith.select %54, %55, %56 : vector<16x32xi1>, vector<16x32xf32>
    %58 = arith.truncf %41 : vector<16x32xf32> to vector<16x32xbf16>
    %59 = arith.truncf %52 : vector<16x32xf32> to vector<16x32xbf16>
    %cst_44 = arith.constant dense<0.000000e+00> : vector<16x32xf32>
    %60 = tpu.matmul %59, %42, %cst_44 {dimension_numbers = #tpu.dot_dimension_numbers<[1], [0], [0], [1], [0, 0, 1, 1], [], []>} : vector<16x32xbf16>, vector<32x32xbf16>, vector<16x32xf32> -> vector<16x32xf32>
    %cst_45 = arith.constant dense<0.000000e+00> : vector<16x32xf32>
    %61 = tpu.matmul %58, %43, %cst_45 {dimension_numbers = #tpu.dot_dimension_numbers<[1], [0], [0], [1], [0, 0, 1, 1], [], []>} : vector<16x32xbf16>, vector<32x32xbf16>, vector<16x32xf32> -> vector<16x32xf32>
    %62 = arith.addf %60, %61 : vector<16x32xf32>
    %63 = arith.truncf %57 : vector<16x32xf32> to vector<16x32xbf16>
    %cst_46 = arith.constant dense<0.000000e+00> : vector<16x32xf32>
    %64 = tpu.matmul %63, %44, %cst_46 {dimension_numbers = #tpu.dot_dimension_numbers<[1], [0], [0], [1], [0, 0, 1, 1], [], []>} : vector<16x32xbf16>, vector<32x32xbf16>, vector<16x32xf32> -> vector<16x32xf32>
    %65 = arith.addf %62, %64 : vector<16x32xf32>
    %66 = vector.broadcast %45 : vector<1x32xf32> to vector<16x32xf32>
    %67 = arith.addf %65, %66 : vector<16x32xf32>
    %cst_47 = arith.constant 0.000000e+00 : f32
    %68 = vector.broadcast %cst_47 : f32 to vector<16x32xf32>
    %69 = arith.maximumf %67, %68 : vector<16x32xf32>
    %70 = arith.truncf %69 : vector<16x32xf32> to vector<16x32xbf16>
    %cst_48 = arith.constant dense<0.000000e+00> : vector<16x32xf32>
    %71 = tpu.matmul %70, %46, %cst_48 {dimension_numbers = #tpu.dot_dimension_numbers<[1], [0], [0], [1], [0, 0, 1, 1], [], []>} : vector<16x32xbf16>, vector<32x32xbf16>, vector<16x32xf32> -> vector<16x32xf32>
    %72 = vector.broadcast %47 : vector<1x32xf32> to vector<16x32xf32>
    %73 = arith.addf %71, %72 : vector<16x32xf32>
    %74 = arith.addf %41, %73 : vector<16x32xf32>
    %75 = arith.truncf %74 : vector<16x32xf32> to vector<16x32xbf16>
    %c0_49 = arith.constant 0 : index
    %c0_50 = arith.constant 0 : index
    %76 = vector.load %arg17[%c0_49, %c0_50] : memref<3x32xbf16, #tpu.memory_space<vmem>>, vector<3x32xbf16>
    %c0_51 = arith.constant 0 : index
    %c0_52 = arith.constant 0 : index
    %77 = vector.load %arg18[%c0_51, %c0_52] : memref<3x1xf32, #tpu.memory_space<vmem>>, vector<3x1xf32>
    %78 = tpu.transpose %75, [1, 0] : vector<16x32xbf16> -> vector<32x16xbf16>
    %cst_53 = arith.constant dense<0.000000e+00> : vector<3x16xf32>
    %79 = tpu.matmul %76, %78, %cst_53 {dimension_numbers = #tpu.dot_dimension_numbers<[1], [0], [0], [1], [0, 0, 1, 1], [], []>} : vector<3x32xbf16>, vector<32x16xbf16>, vector<3x16xf32> -> vector<3x16xf32>
    %80 = vector.broadcast %77 : vector<3x1xf32> to vector<3x16xf32>
    %81 = arith.addf %79, %80 : vector<3x16xf32>
    %c0_54 = arith.constant 0 : index
    %c0_55 = arith.constant 0 : index
    %c0_56 = arith.constant 0 : index
    %82 = vector.load %arg19[%c0_54, %c0_55, %c0_56] : memref<1x3x16xf32, #tpu.memory_space<vmem>>, vector<1x3x16xf32>
    %83 = vector.shape_cast %82 : vector<1x3x16xf32> to vector<3x16xf32>
    %84 = vector.shape_cast %81 : vector<3x16xf32> to vector<1x3x16xf32>
    tpu.vector_store %arg19[%c0_54, %c0_55, %c0_56], %84 {strides = array<i32>} : memref<1x3x16xf32, #tpu.memory_space<vmem>>, vector<1x3x16xf32>,
    return
  }
  func.func @transform_0(%arg0: i32) -> (i32, i32) {
    %c0_i32 = arith.constant 0 : i32
    %c0_i32_0 = arith.constant 0 : i32
    return %arg0, %c0_i32 : i32, i32
  }
  func.func @transform_1(%arg0: i32) -> (i32, i32) {
    %c0_i32 = arith.constant 0 : i32
    %c0_i32_0 = arith.constant 0 : i32
    return %arg0, %c0_i32 : i32, i32
  }
  func.func @transform_2(%arg0: i32) -> (i32, i32) {
    %c0_i32 = arith.constant 0 : i32
    %c0_i32_0 = arith.constant 0 : i32
    %c0_i32_1 = arith.constant 0 : i32
    return %c0_i32, %c0_i32_0 : i32, i32
  }
  func.func @transform_3(%arg0: i32) -> (i32, i32) {
    %c0_i32 = arith.constant 0 : i32
    %c0_i32_0 = arith.constant 0 : i32
    %c0_i32_1 = arith.constant 0 : i32
    return %c0_i32, %c0_i32_0 : i32, i32
  }
  func.func @transform_4(%arg0: i32) -> (i32, i32) {
    %c0_i32 = arith.constant 0 : i32
    %c0_i32_0 = arith.constant 0 : i32
    %c0_i32_1 = arith.constant 0 : i32
    return %c0_i32, %c0_i32_0 : i32, i32
  }
  func.func @transform_5(%arg0: i32) -> (i32, i32) {
    %c0_i32 = arith.constant 0 : i32
    %c0_i32_0 = arith.constant 0 : i32
    %c0_i32_1 = arith.constant 0 : i32
    return %c0_i32, %c0_i32_0 : i32, i32
  }
  func.func @transform_6(%arg0: i32) -> (i32, i32) {
    %c0_i32 = arith.constant 0 : i32
    %c0_i32_0 = arith.constant 0 : i32
    %c0_i32_1 = arith.constant 0 : i32
    return %c0_i32, %c0_i32_0 : i32, i32
  }
  func.func @transform_7(%arg0: i32) -> (i32, i32) {
    %c0_i32 = arith.constant 0 : i32
    %c0_i32_0 = arith.constant 0 : i32
    %c0_i32_1 = arith.constant 0 : i32
    return %c0_i32, %c0_i32_0 : i32, i32
  }
  func.func @transform_8(%arg0: i32) -> (i32, i32) {
    %c0_i32 = arith.constant 0 : i32
    %c0_i32_0 = arith.constant 0 : i32
    %c0_i32_1 = arith.constant 0 : i32
    return %c0_i32, %c0_i32_0 : i32, i32
  }
  func.func @transform_9(%arg0: i32) -> (i32, i32) {
    %c0_i32 = arith.constant 0 : i32
    %c0_i32_0 = arith.constant 0 : i32
    %c0_i32_1 = arith.constant 0 : i32
    return %c0_i32, %c0_i32_0 : i32, i32
  }
  func.func @transform_10(%arg0: i32) -> (i32, i32) {
    %c0_i32 = arith.constant 0 : i32
    %c0_i32_0 = arith.constant 0 : i32
    %c0_i32_1 = arith.constant 0 : i32
    return %c0_i32, %c0_i32_0 : i32, i32
  }
  func.func @transform_11(%arg0: i32) -> (i32, i32) {
    %c0_i32 = arith.constant 0 : i32
    %c0_i32_0 = arith.constant 0 : i32
    %c0_i32_1 = arith.constant 0 : i32
    return %c0_i32, %c0_i32_0 : i32, i32
  }
  func.func @transform_12(%arg0: i32) -> (i32, i32) {
    %c0_i32 = arith.constant 0 : i32
    %c0_i32_0 = arith.constant 0 : i32
    %c0_i32_1 = arith.constant 0 : i32
    return %c0_i32, %c0_i32_0 : i32, i32
  }
  func.func @transform_13(%arg0: i32) -> (i32, i32) {
    %c0_i32 = arith.constant 0 : i32
    %c0_i32_0 = arith.constant 0 : i32
    %c0_i32_1 = arith.constant 0 : i32
    return %c0_i32, %c0_i32_0 : i32, i32
  }
  func.func @transform_14(%arg0: i32) -> (i32, i32) {
    %c0_i32 = arith.constant 0 : i32
    %c0_i32_0 = arith.constant 0 : i32
    %c0_i32_1 = arith.constant 0 : i32
    return %c0_i32, %c0_i32_0 : i32, i32
  }
  func.func @transform_15(%arg0: i32) -> (i32, i32) {
    %c0_i32 = arith.constant 0 : i32
    %c0_i32_0 = arith.constant 0 : i32
    %c0_i32_1 = arith.constant 0 : i32
    return %c0_i32, %c0_i32_0 : i32, i32
  }
  func.func @transform_16(%arg0: i32) -> (i32, i32) {
    %c0_i32 = arith.constant 0 : i32
    %c0_i32_0 = arith.constant 0 : i32
    %c0_i32_1 = arith.constant 0 : i32
    return %c0_i32, %c0_i32_0 : i32, i32
  }
  func.func @transform_17(%arg0: i32) -> (i32, i32) {
    %c0_i32 = arith.constant 0 : i32
    %c0_i32_0 = arith.constant 0 : i32
    %c0_i32_1 = arith.constant 0 : i32
    return %c0_i32, %c0_i32_0 : i32, i32
  }
  func.func @transform_18(%arg0: i32) -> (i32, i32, i32) {
    %c0_i32 = arith.constant 0 : i32
    %c0_i32_0 = arith.constant 0 : i32
    %c0_i32_1 = arith.constant 0 : i32
    return %arg0, %c0_i32, %c0_i32_0 : i32, i32, i32
  }
}

</mosaic_0001>

<llo_original>
// kernel: sstcn_forward.1
$region0: #{sstcn_forward.1}
  #allocation0 [shape = 'u32[]', space=smem, size = 0x4, offset = 0x4, fixed_abs, tag = 'smem constant byte address 0x4 - core index']
  #allocation1 [shape = 'u32[72,128]{1,0:T(1,128)}', space=vmem, size = 0x9000, scoped, tag = 'internal scratch']
  %s0 = inlined_call_operand.vmem [shape: bf16[32,16], index: 0, kind: input, shape index: {}]
  %s1 = inlined_call_operand.vmem [shape: s32[32,1], index: 1, kind: input, shape index: {}]
  %s2 = inlined_call_operand.vmem [shape: bf16[16,32], index: 2, kind: input, shape index: {}]
  %s3 = inlined_call_operand.vmem [shape: f32[1,32], index: 3, kind: input, shape index: {}]
  %s4 = inlined_call_operand.vmem [shape: bf16[32,32], index: 4, kind: input, shape index: {}]
  %s5 = inlined_call_operand.vmem [shape: bf16[32,32], index: 5, kind: input, shape index: {}]
  %s6 = inlined_call_operand.vmem [shape: bf16[32,32], index: 6, kind: input, shape index: {}]
  %s7 = inlined_call_operand.vmem [shape: f32[1,32], index: 7, kind: input, shape index: {}]
  %s8 = inlined_call_operand.vmem [shape: bf16[32,32], index: 8, kind: input, shape index: {}]
  %s9 = inlined_call_operand.vmem [shape: f32[1,32], index: 9, kind: input, shape index: {}]
  %s10 = inlined_call_operand.vmem [shape: bf16[32,32], index: 10, kind: input, shape index: {}]
  %s11 = inlined_call_operand.vmem [shape: bf16[32,32], index: 11, kind: input, shape index: {}]
  %s12 = inlined_call_operand.vmem [shape: bf16[32,32], index: 12, kind: input, shape index: {}]
  %s13 = inlined_call_operand.vmem [shape: f32[1,32], index: 13, kind: input, shape index: {}]
  %s14 = inlined_call_operand.vmem [shape: bf16[32,32], index: 14, kind: input, shape index: {}]
  %s15 = inlined_call_operand.vmem [shape: f32[1,32], index: 15, kind: input, shape index: {}]
  %s16 = inlined_call_operand.vmem [shape: bf16[3,32], index: 16, kind: input, shape index: {}]
  %s17 = inlined_call_operand.vmem [shape: f32[3,1], index: 17, kind: input, shape index: {}]
  %s18 = inlined_call_operand.vmem [shape: f32[2,3,16], index: 18, kind: output, shape index: {}]
  %s19 = sld [smem:[#allocation0]]
  $region105: #{sstcn_forward.1} parent=0
    _
  %s21 = ssub.s32 1, %s19
  %s22 = scalar_select 0, %s21, %s19
  loop: start=0, step=1, limit=4
  $region2: #{sstcn_forward.1} parent=0 // loop_pre_header
    _
  $region3: #{sstcn_forward.1} parent=0 // loop_header
    %s24 = sphi 0, %s28
    %p25 = scmp.ge.s32.totalorder %s24, 4
    %s34 = sphi 0, %s36
    %s37 = sphi 0, %s34
    %s38 = sphi 0, %s37
    %s54 = sphi 0, %s38
    %s60 = sphi 0, %s62
    %s63 = sphi 0, %s60
    %s64 = sphi 0, %s63
    %s80 = sphi 0, %s64
    %s84 = sphi 0, %s84
    %s86 = sphi 0, %s84
    %s87 = sphi 0, %s86
    %s101 = sphi 0, %s87
    %s105 = sphi 0, %s105
    %s107 = sphi 0, %s105
    %s108 = sphi 0, %s107
    %s122 = sphi 0, %s108
    %s126 = sphi 0, %s126
    %s128 = sphi 0, %s126
    %s129 = sphi 0, %s128
    %s143 = sphi 0, %s129
    %s147 = sphi 0, %s147
    %s149 = sphi 0, %s147
    %s150 = sphi 0, %s149
    %s164 = sphi 0, %s150
    %s168 = sphi 0, %s168
    %s170 = sphi 0, %s168
    %s171 = sphi 0, %s170
    %s185 = sphi 0, %s171
    %s189 = sphi 0, %s189
    %s191 = sphi 0, %s189
    %s192 = sphi 0, %s191
    %s206 = sphi 0, %s192
    %s210 = sphi 0, %s210
    %s212 = sphi 0, %s210
    %s213 = sphi 0, %s212
    %s227 = sphi 0, %s213
    %s231 = sphi 0, %s231
    %s233 = sphi 0, %s231
    %s234 = sphi 0, %s233
    %s248 = sphi 0, %s234
    %s252 = sphi 0, %s252
    %s254 = sphi 0, %s252
    %s255 = sphi 0, %s254
    %s269 = sphi 0, %s255
    %s273 = sphi 0, %s273
    %s275 = sphi 0, %s273
    %s276 = sphi 0, %s275
    %s290 = sphi 0, %s276
    %s294 = sphi 0, %s294
    %s296 = sphi 0, %s294
    %s297 = sphi 0, %s296
    %s311 = sphi 0, %s297
    %s315 = sphi 0, %s315
    %s317 = sphi 0, %s315
    %s318 = sphi 0, %s317
    %s332 = sphi 0, %s318
    %s336 = sphi 0, %s336
    %s338 = sphi 0, %s336
    %s339 = sphi 0, %s338
    %s353 = sphi 0, %s339
    %s357 = sphi 0, %s357
    %s359 = sphi 0, %s357
    %s360 = sphi 0, %s359
    %s374 = sphi 0, %s360
    %s378 = sphi 0, %s378
    %s380 = sphi 0, %s378
    %s381 = sphi 0, %s380
    %s395 = sphi 0, %s381
    %s399 = sphi 0, %s399
    %s401 = sphi 0, %s399
    %s402 = sphi 0, %s401
    %s416 = sphi 0, %s402
    %s422 = sphi 0, %s424
    %s425 = sphi 0, %s422
    %s426 = sphi 0, %s425
    %s442 = sphi 0, %s426
  $region4: #{sstcn_forward.1} parent=0 // loop_header_branch
    %27 = sbr.rel (%p25) target = $region8
  $region5: #{sstcn_forward.1} parent=0 // loop_body
    %s29 = ssub.s32 %s24, 1
    %s30 = ssub.s32 %s24, 2
    %s31 = sadd.s32 %s24, 1
    %s32 = ssub.s32 %s24, %s31
    %p33 = scmp.eq.s32.totalorder %s32, 0
    %s35 = sadd.s32 %s34, 1
    %s36 = scalar_select %p33, %s34, %s35
    %p39 = pneg %p33
    %p40 = scmp.eq.s32.totalorder %s24, 1
    %p41 = por %p39, %p40
    %p42 = scmp.ne.s32.totalorder %s34, %s37
    %p43 = scmp.eq.s32.totalorder %s24, 0
    %p44 = por %p42, %p43
    %p45 = scmp.ne.s32.totalorder %s34, %s37
    %p46 = scmp.eq.s32.totalorder %s29, 1
    %p47 = por %p45, %p46
    %p48 = scmp.ne.s32.totalorder %s37, %s38
    %p49 = scmp.eq.s32.totalorder %s29, 0
    %p50 = por %p48, %p49
    %p51 = scmp.ne.s32.totalorder %s37, %s38
    %p52 = scmp.eq.s32.totalorder %s30, 1
    %p53 = por %p51, %p52
    %p55 = scmp.ne.s32.totalorder %s38, %s54
    %p56 = scmp.eq.s32.totalorder %s30, 0
    %p57 = por %p55, %p56
    %s58 = ssub.s32 %s24, %s31
    %p59 = scmp.eq.s32.totalorder %s58, 0
    %s61 = sadd.s32 %s60, 1
    %s62 = scalar_select %p59, %s60, %s61
    %p65 = pneg %p59
    %p66 = scmp.eq.s32.totalorder %s24, 1
    %p67 = por %p65, %p66
    %p68 = scmp.ne.s32.totalorder %s60, %s63
    %p69 = scmp.eq.s32.totalorder %s24, 0
    %p70 = por %p68, %p69
    %p71 = scmp.ne.s32.totalorder %s60, %s63
    %p72 = scmp.eq.s32.totalorder %s29, 1
    %p73 = por %p71, %p72
    %p74 = scmp.ne.s32.totalorder %s63, %s64
    %p75 = scmp.eq.s32.totalorder %s29, 0
    %p76 = por %p74, %p75
    %p77 = scmp.ne.s32.totalorder %s63, %s64
    %p78 = scmp.eq.s32.totalorder %s30, 1
    %p79 = por %p77, %p78
    %p81 = scmp.ne.s32.totalorder %s64, %s80
    %p82 = scmp.eq.s32.totalorder %s30, 0
    %p83 = por %p81, %p82
    %s85 = sadd.s32 %s84, 1
    %p88 = scmp.eq.s32.totalorder %s24, 1
    %p89 = scmp.ne.s32.totalorder %s84, %s86
    %p90 = scmp.eq.s32.totalorder %s24, 0
    %p91 = por %p89, %p90
    %p92 = scmp.ne.s32.totalorder %s84, %s86
    %p93 = scmp.eq.s32.totalorder %s29, 1
    %p94 = por %p92, %p93
    %p95 = scmp.ne.s32.totalorder %s86, %s87
    %p96 = scmp.eq.s32.totalorder %s29, 0
    %p97 = por %p95, %p96
    %p98 = scmp.ne.s32.totalorder %s86, %s87
    %p99 = scmp.eq.s32.totalorder %s30, 1
    %p100 = por %p98, %p99
    %p102 = scmp.ne.s32.totalorder %s87, %s101
    %p103 = scmp.eq.s32.totalorder %s30, 0
    %p104 = por %p102, %p103
    %s106 = sadd.s32 %s105, 1
    %p109 = scmp.eq.s32.totalorder %s24, 1
    %p110 = scmp.ne.s32.totalorder %s105, %s107
    %p111 = scmp.eq.s32.totalorder %s24, 0
    %p112 = por %p110, %p111
    %p113 = scmp.ne.s32.totalorder %s105, %s107
    %p114 = scmp.eq.s32.totalorder %s29, 1
    %p115 = por %p113, %p114
    %p116 = scmp.ne.s32.totalorder %s107, %s108
    %p117 = scmp.eq.s32.totalorder %s29, 0
    %p118 = por %p116, %p117
    %p119 = scmp.ne.s32.totalorder %s107, %s108
    %p120 = scmp.eq.s32.totalorder %s30, 1
    %p121 = por %p119, %p120
    %p123 = scmp.ne.s32.totalorder %s108, %s122
    %p124 = scmp.eq.s32.totalorder %s30, 0
    %p125 = por %p123, %p124
    %s127 = sadd.s32 %s126, 1
    %p130 = scmp.eq.s32.totalorder %s24, 1
    %p131 = scmp.ne.s32.totalorder %s126, %s128
    %p132 = scmp.eq.s32.totalorder %s24, 0
    %p133 = por %p131, %p132
    %p134 = scmp.ne.s32.totalorder %s126, %s128
    %p135 = scmp.eq.s32.totalorder %s29, 1
    %p136 = por %p134, %p135
    %p137 = scmp.ne.s32.totalorder %s128, %s129
    %p138 = scmp.eq.s32.totalorder %s29, 0
    %p139 = por %p137, %p138
    %p140 = scmp.ne.s32.totalorder %s128, %s129
    %p141 = scmp.eq.s32.totalorder %s30, 1
    %p142 = por %p140, %p141
    %p144 = scmp.ne.s32.totalorder %s129, %s143
    %p145 = scmp.eq.s32.totalorder %s30, 0
    %p146 = por %p144, %p145
    %s148 = sadd.s32 %s147, 1
    %p151 = scmp.eq.s32.totalorder %s24, 1
    %p152 = scmp.ne.s32.totalorder %s147, %s149
    %p153 = scmp.eq.s32.totalorder %s24, 0
    %p154 = por %p152, %p153
    %p155 = scmp.ne.s32.totalorder %s147, %s149
    %p156 = scmp.eq.s32.totalorder %s29, 1
    %p157 = por %p155, %p156
    %p158 = scmp.ne.s32.totalorder %s149, %s150
    %p159 = scmp.eq.s32.totalorder %s29, 0
    %p160 = por %p158, %p159
    %p161 = scmp.ne.s32.totalorder %s149, %s150
    %p162 = scmp.eq.s32.totalorder %s30, 1
    %p163 = por %p161, %p162
    %p165 = scmp.ne.s32.totalorder %s150, %s164
    %p166 = scmp.eq.s32.totalorder %s30, 0
    %p167 = por %p165, %p166
    %s169 = sadd.s32 %s168, 1
    %p172 = scmp.eq.s32.totalorder %s24, 1
    %p173 = scmp.ne.s32.totalorder %s168, %s170
    %p174 = scmp.eq.s32.totalorder %s24, 0
    %p175 = por %p173, %p174
    %p176 = scmp.ne.s32.totalorder %s168, %s170
    %p177 = scmp.eq.s32.totalorder %s29, 1
    %p178 = por %p176, %p177
    %p179 = scmp.ne.s32.totalorder %s170, %s171
    %p180 = scmp.eq.s32.totalorder %s29, 0
    %p181 = por %p179, %p180
    %p182 = scmp.ne.s32.totalorder %s170, %s171
    %p183 = scmp.eq.s32.totalorder %s30, 1
    %p184 = por %p182, %p183
    %p186 = scmp.ne.s32.totalorder %s171, %s185
    %p187 = scmp.eq.s32.totalorder %s30, 0
    %p188 = por %p186, %p187
    %s190 = sadd.s32 %s189, 1
    %p193 = scmp.eq.s32.totalorder %s24, 1
    %p194 = scmp.ne.s32.totalorder %s189, %s191
    %p195 = scmp.eq.s32.totalorder %s24, 0
    %p196 = por %p194, %p195
    %p197 = scmp.ne.s32.totalorder %s189, %s191
    %p198 = scmp.eq.s32.totalorder %s29, 1
    %p199 = por %p197, %p198
    %p200 = scmp.ne.s32.totalorder %s191, %s192
    %p201 = scmp.eq.s32.totalorder %s29, 0
    %p202 = por %p200, %p201
    %p203 = scmp.ne.s32.totalorder %s191, %s192
    %p204 = scmp.eq.s32.totalorder %s30, 1
    %p205 = por %p203, %p204
    %p207 = scmp.ne.s32.totalorder %s192, %s206
    %p208 = scmp.eq.s32.totalorder %s30, 0
    %p209 = por %p207, %p208
    %s211 = sadd.s32 %s210, 1
    %p214 = scmp.eq.s32.totalorder %s24, 1
    %p215 = scmp.ne.s32.totalorder %s210, %s212
    %p216 = scmp.eq.s32.totalorder %s24, 0
    %p217 = por %p215, %p216
    %p218 = scmp.ne.s32.totalorder %s210, %s212
    %p219 = scmp.eq.s32.totalorder %s29, 1
    %p220 = por %p218, %p219
    %p221 = scmp.ne.s32.totalorder %s212, %s213
    %p222 = scmp.eq.s32.totalorder %s29, 0
    %p223 = por %p221, %p222
    %p224 = scmp.ne.s32.totalorder %s212, %s213
    %p225 = scmp.eq.s32.totalorder %s30, 1
    %p226 = por %p224, %p225
    %p228 = scmp.ne.s32.totalorder %s213, %s227
    %p229 = scmp.eq.s32.totalorder %s30, 0
    %p230 = por %p228, %p229
    %s232 = sadd.s32 %s231, 1
    %p235 = scmp.eq.s32.totalorder %s24, 1
    %p236 = scmp.ne.s32.totalorder %s231, %s233
    %p237 = scmp.eq.s32.totalorder %s24, 0
    %p238 = por %p236, %p237
    %p239 = scmp.ne.s32.totalorder %s231, %s233
    %p240 = scmp.eq.s32.totalorder %s29, 1
    %p241 = por %p239, %p240
    %p242 = scmp.ne.s32.totalorder %s233, %s234
    %p243 = scmp.eq.s32.totalorder %s29, 0
    %p244 = por %p242, %p243
    %p245 = scmp.ne.s32.totalorder %s233, %s234
    %p246 = scmp.eq.s32.totalorder %s30, 1
    %p247 = por %p245, %p246
    %p249 = scmp.ne.s32.totalorder %s234, %s248
    %p250 = scmp.eq.s32.totalorder %s30, 0
    %p251 = por %p249, %p250
    %s253 = sadd.s32 %s252, 1
    %p256 = scmp.eq.s32.totalorder %s24, 1
    %p257 = scmp.ne.s32.totalorder %s252, %s254
    %p258 = scmp.eq.s32.totalorder %s24, 0
    %p259 = por %p257, %p258
    %p260 = scmp.ne.s32.totalorder %s252, %s254
    %p261 = scmp.eq.s32.totalorder %s29, 1
    %p262 = por %p260, %p261
    %p263 = scmp.ne.s32.totalorder %s254, %s255
    %p264 = scmp.eq.s32.totalorder %s29, 0
    %p265 = por %p263, %p264
    %p266 = scmp.ne.s32.totalorder %s254, %s255
    %p267 = scmp.eq.s32.totalorder %s30, 1
    %p268 = por %p266, %p267
    %p270 = scmp.ne.s32.totalorder %s255, %s269
    %p271 = scmp.eq.s32.totalorder %s30, 0
    %p272 = por %p270, %p271
    %s274 = sadd.s32 %s273, 1
    %p277 = scmp.eq.s32.totalorder %s24, 1
    %p278 = scmp.ne.s32.totalorder %s273, %s275
    %p279 = scmp.eq.s32.totalorder %s24, 0
    %p280 = por %p278, %p279
    %p281 = scmp.ne.s32.totalorder %s273, %s275
    %p282 = scmp.eq.s32.totalorder %s29, 1
    %p283 = por %p281, %p282
    %p284 = scmp.ne.s32.totalorder %s275, %s276
    %p285 = scmp.eq.s32.totalorder %s29, 0
    %p286 = por %p284, %p285
    %p287 = scmp.ne.s32.totalorder %s275, %s276
    %p288 = scmp.eq.s32.totalorder %s30, 1
    %p289 = por %p287, %p288
    %p291 = scmp.ne.s32.totalorder %s276, %s290
    %p292 = scmp.eq.s32.totalorder %s30, 0
    %p293 = por %p291, %p292
    %s295 = sadd.s32 %s294, 1
    %p298 = scmp.eq.s32.totalorder %s24, 1
    %p299 = scmp.ne.s32.totalorder %s294, %s296
    %p300 = scmp.eq.s32.totalorder %s24, 0
    %p301 = por %p299, %p300
    %p302 = scmp.ne.s32.totalorder %s294, %s296
    %p303 = scmp.eq.s32.totalorder %s29, 1
    %p304 = por %p302, %p303
    %p305 = scmp.ne.s32.totalorder %s296, %s297
    %p306 = scmp.eq.s32.totalorder %s29, 0
    %p307 = por %p305, %p306
    %p308 = scmp.ne.s32.totalorder %s296, %s297
    %p309 = scmp.eq.s32.totalorder %s30, 1
    %p310 = por %p308, %p309
    %p312 = scmp.ne.s32.totalorder %s297, %s311
    %p313 = scmp.eq.s32.totalorder %s30, 0
    %p314 = por %p312, %p313
    %s316 = sadd.s32 %s315, 1
    %p319 = scmp.eq.s32.totalorder %s24, 1
    %p320 = scmp.ne.s32.totalorder %s315, %s317
    %p321 = scmp.eq.s32.totalorder %s24, 0
    %p322 = por %p320, %p321
    %p323 = scmp.ne.s32.totalorder %s315, %s317
    %p324 = scmp.eq.s32.totalorder %s29, 1
    %p325 = por %p323, %p324
    %p326 = scmp.ne.s32.totalorder %s317, %s318
    %p327 = scmp.eq.s32.totalorder %s29, 0
    %p328 = por %p326, %p327
    %p329 = scmp.ne.s32.totalorder %s317, %s318
    %p330 = scmp.eq.s32.totalorder %s30, 1
    %p331 = por %p329, %p330
    %p333 = scmp.ne.s32.totalorder %s318, %s332
    %p334 = scmp.eq.s32.totalorder %s30, 0
    %p335 = por %p333, %p334
    %s337 = sadd.s32 %s336, 1
    %p340 = scmp.eq.s32.totalorder %s24, 1
    %p341 = scmp.ne.s32.totalorder %s336, %s338
    %p342 = scmp.eq.s32.totalorder %s24, 0
    %p343 = por %p341, %p342
    %p344 = scmp.ne.s32.totalorder %s336, %s338
    %p345 = scmp.eq.s32.totalorder %s29, 1
    %p346 = por %p344, %p345
    %p347 = scmp.ne.s32.totalorder %s338, %s339
    %p348 = scmp.eq.s32.totalorder %s29, 0
    %p349 = por %p347, %p348
    %p350 = scmp.ne.s32.totalorder %s338, %s339
    %p351 = scmp.eq.s32.totalorder %s30, 1
    %p352 = por %p350, %p351
    %p354 = scmp.ne.s32.totalorder %s339, %s353
    %p355 = scmp.eq.s32.totalorder %s30, 0
    %p356 = por %p354, %p355
    %s358 = sadd.s32 %s357, 1
    %p361 = scmp.eq.s32.totalorder %s24, 1
    %p362 = scmp.ne.s32.totalorder %s357, %s359
    %p363 = scmp.eq.s32.totalorder %s24, 0
    %p364 = por %p362, %p363
    %p365 = scmp.ne.s32.totalorder %s357, %s359
    %p366 = scmp.eq.s32.totalorder %s29, 1
    %p367 = por %p365, %p366
    %p368 = scmp.ne.s32.totalorder %s359, %s360
    %p369 = scmp.eq.s32.totalorder %s29, 0
    %p370 = por %p368, %p369
    %p371 = scmp.ne.s32.totalorder %s359, %s360
    %p372 = scmp.eq.s32.totalorder %s30, 1
    %p373 = por %p371, %p372
    %p375 = scmp.ne.s32.totalorder %s360, %s374
    %p376 = scmp.eq.s32.totalorder %s30, 0
    %p377 = por %p375, %p376
    %s379 = sadd.s32 %s378, 1
    %p382 = scmp.eq.s32.totalorder %s24, 1
    %p383 = scmp.ne.s32.totalorder %s378, %s380
    %p384 = scmp.eq.s32.totalorder %s24, 0
    %p385 = por %p383, %p384
    %p386 = scmp.ne.s32.totalorder %s378, %s380
    %p387 = scmp.eq.s32.totalorder %s29, 1
    %p388 = por %p386, %p387
    %p389 = scmp.ne.s32.totalorder %s380, %s381
    %p390 = scmp.eq.s32.totalorder %s29, 0
    %p391 = por %p389, %p390
    %p392 = scmp.ne.s32.totalorder %s380, %s381
    %p393 = scmp.eq.s32.totalorder %s30, 1
    %p394 = por %p392, %p393
    %p396 = scmp.ne.s32.totalorder %s381, %s395
    %p397 = scmp.eq.s32.totalorder %s30, 0
    %p398 = por %p396, %p397
    %s400 = sadd.s32 %s399, 1
    %p403 = scmp.eq.s32.totalorder %s24, 1
    %p404 = scmp.ne.s32.totalorder %s399, %s401
    %p405 = scmp.eq.s32.totalorder %s24, 0
    %p406 = por %p404, %p405
    %p407 = scmp.ne.s32.totalorder %s399, %s401
    %p408 = scmp.eq.s32.totalorder %s29, 1
    %p409 = por %p407, %p408
    %p410 = scmp.ne.s32.totalorder %s401, %s402
    %p411 = scmp.eq.s32.totalorder %s29, 0
    %p412 = por %p410, %p411
    %p413 = scmp.ne.s32.totalorder %s401, %s402
    %p414 = scmp.eq.s32.totalorder %s30, 1
    %p415 = por %p413, %p414
    %p417 = scmp.ne.s32.totalorder %s402, %s416
    %p418 = scmp.eq.s32.totalorder %s30, 0
    %p419 = por %p417, %p418
    %s420 = ssub.s32 %s24, %s31
    %p421 = scmp.eq.s32.totalorder %s420, 0
    %s423 = sadd.s32 %s422, 1
    %s424 = scalar_select %p421, %s422, %s423
    %p427 = pneg %p421
    %p428 = scmp.eq.s32.totalorder %s24, 1
    %p429 = por %p427, %p428
    %p430 = scmp.ne.s32.totalorder %s422, %s425
    %p431 = scmp.eq.s32.totalorder %s24, 0
    %p432 = por %p430, %p431
    %p433 = scmp.ne.s32.totalorder %s422, %s425
    %p434 = scmp.eq.s32.totalorder %s29, 1
    %p435 = por %p433, %p434
    %p436 = scmp.ne.s32.totalorder %s425, %s426
    %p437 = scmp.eq.s32.totalorder %s29, 0
    %p438 = por %p436, %p437
    %p439 = scmp.ne.s32.totalorder %s425, %s426
    %p440 = scmp.eq.s32.totalorder %s30, 1
    %p441 = por %p439, %p440
    %p443 = scmp.ne.s32.totalorder %s426, %s442
    %p444 = scmp.eq.s32.totalorder %s30, 0
    %p445 = por %p443, %p444
    %p446 = scmp.le.s32.totalorder 1, %s24
    %p447 = scmp.lt.s32.totalorder %s24, 3
    %p448 = pnand %p446, %p447
    %p449 = pneg %p448
    // Predicated region
    $region9: #{sstcn_forward.1} parent=5 // pred_check
      _
    $region10: #{sstcn_forward.1} parent=5 // pred_check_branch
      %451 = sbr.rel (%p448) target = $region12
    $region11: #{sstcn_forward.1} parent=5 // pred_region
      %s452 = ssub.s32 %s24, 1
      // Predicated region
      $region13: #{sstcn_forward.1} parent=11 // pred_check
        %p453 = pneg %p97
      $region14: #{sstcn_forward.1} parent=11 // pred_check_branch
        %455 = sbr.rel (%p453) target = $region16
      $region15: #{sstcn_forward.1} parent=11 // pred_region
        _
      $region16: #{sstcn_forward.1} parent=11 // pred_fallthru
        _
      // Predicated region
      $region17: #{sstcn_forward.1} parent=11 // pred_check
        %p456 = pneg %p118
      $region18: #{sstcn_forward.1} parent=11 // pred_check_branch
        %458 = sbr.rel (%p456) target = $region20
      $region19: #{sstcn_forward.1} parent=11 // pred_region
        _
      $region20: #{sstcn_forward.1} parent=11 // pred_fallthru
        _
      // Predicated region
      $region21: #{sstcn_forward.1} parent=11 // pred_check
        %p459 = pneg %p139
      $region22: #{sstcn_forward.1} parent=11 // pred_check_branch
        %461 = sbr.rel (%p459) target = $region24
      $region23: #{sstcn_forward.1} parent=11 // pred_region
        _
      $region24: #{sstcn_forward.1} parent=11 // pred_fallthru
        _
      // Predicated region
      $region25: #{sstcn_forward.1} parent=11 // pred_check
        %p462 = pneg %p160
      $region26: #{sstcn_forward.1} parent=11 // pred_check_branch
        %464 = sbr.rel (%p462) target = $region28
      $region27: #{sstcn_forward.1} parent=11 // pred_region
        _
      $region28: #{sstcn_forward.1} parent=11 // pred_fallthru
        _
      // Predicated region
      $region29: #{sstcn_forward.1} parent=11 // pred_check
        %p465 = pneg %p181
      $region30: #{sstcn_forward.1} parent=11 // pred_check_branch
        %467 = sbr.rel (%p465) target = $region32
      $region31: #{sstcn_forward.1} parent=11 // pred_region
        _
      $region32: #{sstcn_forward.1} parent=11 // pred_fallthru
        _
      // Predicated region
      $region33: #{sstcn_forward.1} parent=11 // pred_check
        %p468 = pneg %p202
      $region34: #{sstcn_forward.1} parent=11 // pred_check_branch
        %470 = sbr.rel (%p468) target = $region36
      $region35: #{sstcn_forward.1} parent=11 // pred_region
        _
      $region36: #{sstcn_forward.1} parent=11 // pred_fallthru
        _
      // Predicated region
      $region37: #{sstcn_forward.1} parent=11 // pred_check
        %p471 = pneg %p223
      $region38: #{sstcn_forward.1} parent=11 // pred_check_branch
        %473 = sbr.rel (%p471) target = $region40
      $region39: #{sstcn_forward.1} parent=11 // pred_region
        _
      $region40: #{sstcn_forward.1} parent=11 // pred_fallthru
        _
      // Predicated region
      $region41: #{sstcn_forward.1} parent=11 // pred_check
        %p474 = pneg %p244
      $region42: #{sstcn_forward.1} parent=11 // pred_check_branch
        %476 = sbr.rel (%p474) target = $region44
      $region43: #{sstcn_forward.1} parent=11 // pred_region
        _
      $region44: #{sstcn_forward.1} parent=11 // pred_fallthru
        _
      // Predicated region
      $region45: #{sstcn_forward.1} parent=11 // pred_check
        %p477 = pneg %p265
      $region46: #{sstcn_forward.1} parent=11 // pred_check_branch
        %479 = sbr.rel (%p477) target = $region48
      $region47: #{sstcn_forward.1} parent=11 // pred_region
        _
      $region48: #{sstcn_forward.1} parent=11 // pred_fallthru
        _
      // Predicated region
      $region49: #{sstcn_forward.1} parent=11 // pred_check
        %p480 = pneg %p286
      $region50: #{sstcn_forward.1} parent=11 // pred_check_branch
        %482 = sbr.rel (%p480) target = $region52
      $region51: #{sstcn_forward.1} parent=11 // pred_region
        _
      $region52: #{sstcn_forward.1} parent=11 // pred_fallthru
        _
      // Predicated region
      $region53: #{sstcn_forward.1} parent=11 // pred_check
        %p483 = pneg %p307
      $region54: #{sstcn_forward.1} parent=11 // pred_check_branch
        %485 = sbr.rel (%p483) target = $region56
      $region55: #{sstcn_forward.1} parent=11 // pred_region
        _
      $region56: #{sstcn_forward.1} parent=11 // pred_fallthru
        _
      // Predicated region
      $region57: #{sstcn_forward.1} parent=11 // pred_check
        %p486 = pneg %p328
      $region58: #{sstcn_forward.1} parent=11 // pred_check_branch
        %488 = sbr.rel (%p486) target = $region60
      $region59: #{sstcn_forward.1} parent=11 // pred_region
        _
      $region60: #{sstcn_forward.1} parent=11 // pred_fallthru
        _
      // Predicated region
      $region61: #{sstcn_forward.1} parent=11 // pred_check
        %p489 = pneg %p349
      $region62: #{sstcn_forward.1} parent=11 // pred_check_branch
        %491 = sbr.rel (%p489) target = $region64
      $region63: #{sstcn_forward.1} parent=11 // pred_region
        _
      $region64: #{sstcn_forward.1} parent=11 // pred_fallthru
        _
      // Predicated region
      $region65: #{sstcn_forward.1} parent=11 // pred_check
        %p492 = pneg %p370
      $region66: #{sstcn_forward.1} parent=11 // pred_check_branch
        %494 = sbr.rel (%p492) target = $region68
      $region67: #{sstcn_forward.1} parent=11 // pred_region
        _
      $region68: #{sstcn_forward.1} parent=11 // pred_fallthru
        _
      // Predicated region
      $region69: #{sstcn_forward.1} parent=11 // pred_check
        %p495 = pneg %p391
      $region70: #{sstcn_forward.1} parent=11 // pred_check_branch
        %497 = sbr.rel (%p495) target = $region72
      $region71: #{sstcn_forward.1} parent=11 // pred_region
        _
      $region72: #{sstcn_forward.1} parent=11 // pred_fallthru
        _
      // Predicated region
      $region73: #{sstcn_forward.1} parent=11 // pred_check
        %p498 = pneg %p412
      $region74: #{sstcn_forward.1} parent=11 // pred_check_branch
        %500 = sbr.rel (%p498) target = $region76
      $region75: #{sstcn_forward.1} parent=11 // pred_region
        _
      $region76: #{sstcn_forward.1} parent=11 // pred_fallthru
        _
    $region12: #{sstcn_forward.1} parent=5 // pred_fallthru
      _
    %p501 = scmp.lt.s32.totalorder %s24, 2
    // Predicated region
    $region77: #{sstcn_forward.1} parent=5 // pred_check
      %p502 = pneg %p501
    $region78: #{sstcn_forward.1} parent=5 // pred_check_branch
      %504 = sbr.rel (%p502) target = $region80
    $region79: #{sstcn_forward.1} parent=5 // pred_region
      // Predicated region
      $region81: #{sstcn_forward.1} parent=79 // pred_check
        %p505 = pneg %p44
      $region82: #{sstcn_forward.1} parent=79 // pred_check_branch
        %507 = sbr.rel (%p505) target = $region84
      $region83: #{sstcn_forward.1} parent=79 // pred_region
        %s508 = smul.u32 2, %s24
        %p509 = scmp.lt.s32.totalorder %s508, 3
        %s510 = scalar_select %p509, %s508, 3
        %s511 = smul.addr %s510, 4
        %s512 = scalar_lea.vmem %s0, %s511
        %s513 = smul.u32 2, %s24
      $region84: #{sstcn_forward.1} parent=79 // pred_fallthru
        _
      // Predicated region
      $region85: #{sstcn_forward.1} parent=79 // pred_check
        %p514 = pneg %p70
      $region86: #{sstcn_forward.1} parent=79 // pred_check_branch
        %516 = sbr.rel (%p514) target = $region88
      $region87: #{sstcn_forward.1} parent=79 // pred_region
        %s517 = smul.u32 2, %s24
        %p518 = scmp.lt.s32.totalorder %s517, 3
        %s519 = scalar_select %p518, %s517, 3
        %s520 = smul.addr %s519, 8
        %s521 = scalar_lea.vmem %s1, %s520
        %s522 = smul.u32 2, %s24
      $region88: #{sstcn_forward.1} parent=79 // pred_fallthru
        _
    $region80: #{sstcn_forward.1} parent=5 // pred_fallthru
      _
    %p523 = scmp.le.s32.totalorder 1, %s24
    %p524 = scmp.lt.s32.totalorder %s24, 3
    %p525 = pnand %p523, %p524
    %p526 = pneg %p525
    // Predicated region
    $region89: #{sstcn_forward.1} parent=5 // pred_check
      _
    $region90: #{sstcn_forward.1} parent=5 // pred_check_branch
      %528 = sbr.rel (%p525) target = $region92
    $region91: #{sstcn_forward.1} parent=5 // pred_region
      %s529 = ssub.s32 %s24, 1
      %s530 = smul.u32 2, %s29
      %p531 = scmp.lt.s32.totalorder %s530, 3
      %s532 = scalar_select %p531, %s530, 3
      %s533 = smul.addr %s532, 4
      %s534 = scalar_lea.vmem %s0, %s533
      %p535 = pneg %p50
      %p536 = pneg %p47
      %s537 = smul.u32 2, %s29
      %p538 = scmp.lt.s32.totalorder %s537, 3
      %s539 = scalar_select %p538, %s537, 3
      %s540 = smul.addr %s539, 8
      %s541 = scalar_lea.vmem %s1, %s540
      %p542 = pneg %p76
      %p543 = pneg %p73
      %p544 = pneg %p97
      %p545 = pneg %p94
      %p546 = pneg %p118
      %p547 = pneg %p115
      %p548 = pneg %p139
      %p549 = pneg %p136
      %p550 = pneg %p160
      %p551 = pneg %p157
      %p552 = pneg %p181
      %p553 = pneg %p178
      %p554 = pneg %p202
      %p555 = pneg %p199
      %p556 = pneg %p223
      %p557 = pneg %p220
      %p558 = pneg %p244
      %p559 = pneg %p241
      %p560 = pneg %p265
      %p561 = pneg %p262
      %p562 = pneg %p286
      %p563 = pneg %p283
      %p564 = pneg %p307
      %p565 = pneg %p304
      %p566 = pneg %p328
      %p567 = pneg %p325
      %p568 = pneg %p349
      %p569 = pneg %p346
      %p570 = pneg %p370
      %p571 = pneg %p367
      %p572 = pneg %p391
      %p573 = pneg %p388
      %p574 = pneg %p412
      %p575 = pneg %p409
      %p576 = pneg %p438
      %p577 = pneg %p435
      %p578 = scmp.lt.s32.totalorder %s29, 1
      %s579 = scalar_select %p578, %s29, 1
      %s580 = smul.addr %s579, 4
      %s581 = scalar_lea.vmem %s18, %s580
      %s582 = smul.u32 2, %s29
      %p583 = scmp.lt.s32.totalorder %s582, 3
      %s584 = scalar_select %p583, %s582, 3
      %s585 = smul.addr %s584, 4
      %s586 = scalar_lea.vmem %s0, %s585
      %s587 = smul.u32 2, %s29
      %s588 = smul.u32 2, %s29
      %p589 = scmp.lt.s32.totalorder %s588, 3
      %s590 = scalar_select %p589, %s588, 3
      %s591 = smul.addr %s590, 8
      %s592 = scalar_lea.vmem %s1, %s591
      %s593 = smul.u32 2, %s29
      %p594 = scmp.lt.s32.totalorder %s29, 1
      %s595 = scalar_select %p594, %s29, 1
      %s596 = smul.addr %s595, 4
      %s597 = scalar_lea.vmem %s18, %s596
      %v599 = vld [vmem:[%s586] sm:$0xf]
      %v600 = vld [vmem:[%s586 + $0x4] sm:$0xf]
      %v601 = vld [vmem:[%s2] sm:$0xf]
      %v602 = vld [vmem:[%s2 + $0x4] sm:$0xf]
      %v603 = vld [vmem:[%s3] sm:$0x1]
      %v605 = vperm.slane %v603, 0
      %v609 = vunpack.c.l.b16 %v599
      %v610 = vunpack.c.l.b16 %v600
      %v611 = vpack.c.b16 %v610, %v609
      %v614 = vunpack.c.l.b16 %v601
      %v615 = vunpack.c.l.b16 %v602
      %v616 = vpack.c.b16 %v615, %v614
      %vm618 = vcmask 130048
      %v620 = vsel %vm618, %v611, 0
      %622 = vmatpush.bf16.msra.mxu0 0
      %623 = vmatpush.bf16.msra.mxu0 0
      %624 = vmatpush.bf16.msra.mxu0 0
      %625 = vmatpush.bf16.msra.mxu0 0
      %626 = vmatpush.bf16.msra.mxu0 0
      %627 = vmatpush.bf16.msra.mxu0 0
      %628 = vmatpush.bf16.msra.mxu0 0
      %629 = vmatpush.bf16.msra.mxu0 %v616
      %630 = vmatmul.bf16.gmra.mxu0 %v620
      %v631 = vpop.f32.mrf.mxu0
      %v632 = vadd.f32 %v605, %v631
      %v633 = vpop.f32.mrf.mxu0
      %v634 = vadd.f32 %v605, %v633
      %635 = vdwg.mxu0
      %v636 = vld [vmem:[%s592] sm:$0xff]
      %v637 = vld [vmem:[%s592 + $0x8] sm:$0xff]
      %638 = vset.pattern.permute.xlu0 0
      %639 = vperm.xlu0 %638, %v636
      %v640 = vpop.permute.xlu0 %639
      %641 = vset.pattern.permute.xlu0 0
      %642 = vperm.xlu0 %641, %v637
      %v643 = vpop.permute.xlu0 %642
      %v644 = vld [vmem:[%s4] sm:$0xf]
      %v645 = vld [vmem:[%s4 + $0x4] sm:$0xf]
      %v646 = vld [vmem:[%s4 + $0x8] sm:$0xf]
      %v647 = vld [vmem:[%s4 + $0xc] sm:$0xf]
      %v648 = vld [vmem:[%s5] sm:$0xf]
      %v649 = vld [vmem:[%s5 + $0x4] sm:$0xf]
      %v650 = vld [vmem:[%s5 + $0x8] sm:$0xf]
      %v651 = vld [vmem:[%s5 + $0xc] sm:$0xf]
      %v652 = vld [vmem:[%s6] sm:$0xf]
      %v653 = vld [vmem:[%s6 + $0x4] sm:$0xf]
      %v654 = vld [vmem:[%s6 + $0x8] sm:$0xf]
      %v655 = vld [vmem:[%s6 + $0xc] sm:$0xf]
      %v656 = vld [vmem:[%s7] sm:$0x1]
      %v657 = vld [vmem:[%s8] sm:$0xf]
      %v658 = vld [vmem:[%s8 + $0x4] sm:$0xf]
      %v659 = vld [vmem:[%s8 + $0x8] sm:$0xf]
      %v660 = vld [vmem:[%s8 + $0xc] sm:$0xf]
      %v661 = vld [vmem:[%s9] sm:$0x1]
      %vm662 = vcmp.ge.s32.totalorder %v640, 1
      %vm663 = vcmp.ge.s32.totalorder %v643, 1
      %v664 = vrot.slane %v632, 7
      %v665 = vrot.slane %v634, 7
      %v666 = vlaneseq
      %v667 = vshrl.u32 %v666, 7
      %vm668 = vcmp.lt.s32.totalorder %v667, 1
      %v669 = vsel %vm668, %v664, %v665
      %v670 = vsel %vm668, %v665, %v664
      %v671 = vsel %vm662, %v670, 0.0
      %v672 = vsel %vm663, %v669, 0.0
      %vm673 = vcmp.lt.s32.totalorder %v640, 15
      %vm674 = vcmp.lt.s32.totalorder %v643, 15
      %v675 = vrot.slane %v632, 1
      %v676 = vrot.slane %v634, 1
      %vm677 = vcmp.lt.s32.totalorder %v667, 7
      %v678 = vsel %vm677, %v675, %v676
      %v679 = vsel %vm677, %v676, %v675
      %v680 = vsel %vm673, %v678, 0.0
      %v681 = vsel %vm674, %v679, 0.0
      %v682 = vpack.c.bf16 %v634, %v632
      %v683 = vpack.c.bf16 %v672, %v671
      %v688 = vunpack.c.l.b16 %v648
      %v689 = vunpack.c.l.b16 %v649
      %v690 = vunpack.c.l.b16 %v650
      %v691 = vunpack.c.l.b16 %v651
      %v692 = vpack.c.b16 %v689, %v688
      %v693 = vpack.c.b16 %v691, %v690
      %vm696 = vcmask 261120
      %v698 = vsel %vm696, %v682, 0
      %700 = vmatpush.bf16.msra.mxu0 0
      %701 = vmatpush.bf16.msra.mxu0 0
      %702 = vmatpush.bf16.msra.mxu0 0
      %703 = vmatpush.bf16.msra.mxu0 0
      %704 = vmatpush.bf16.msra.mxu0 0
      %705 = vmatpush.bf16.msra.mxu0 0
      %706 = vmatpush.bf16.msra.mxu0 %v693
      %707 = vmatpush.bf16.msra.mxu0 %v692
      %708 = vmatmul.bf16.gmra.mxu0 %v698
      %v709 = vpop.f32.mrf.mxu0
      %v710 = vadd.f32 0.0, %v709
      %v711 = vpop.f32.mrf.mxu0
      %v712 = vadd.f32 0.0, %v711
      %713 = vdwg.mxu0
      %v718 = vunpack.c.l.b16 %v644
      %v719 = vunpack.c.l.b16 %v645
      %v720 = vunpack.c.l.b16 %v646
      %v721 = vunpack.c.l.b16 %v647
      %v722 = vpack.c.b16 %v719, %v718
      %v723 = vpack.c.b16 %v721, %v720
      %v727 = vsel %vm696, %v683, 0
      %729 = vmatpush.bf16.msra.mxu0 0
      %730 = vmatpush.bf16.msra.mxu0 0
      %731 = vmatpush.bf16.msra.mxu0 0
      %732 = vmatpush.bf16.msra.mxu0 0
      %733 = vmatpush.bf16.msra.mxu0 0
      %734 = vmatpush.bf16.msra.mxu0 0
      %735 = vmatpush.bf16.msra.mxu0 %v723
      %736 = vmatpush.bf16.msra.mxu0 %v722
      %737 = vmatmul.bf16.gmra.mxu0 %v727
      %v738 = vpop.f32.mrf.mxu0
      %v739 = vadd.f32 %v710, %v738
      %v740 = vpop.f32.mrf.mxu0
      %v741 = vadd.f32 %v712, %v740
      %742 = vdwg.mxu0
      %v743 = vpack.c.bf16 %v681, %v680
      %v748 = vunpack.c.l.b16 %v652
      %v749 = vunpack.c.l.b16 %v653
      %v750 = vunpack.c.l.b16 %v654
      %v751 = vunpack.c.l.b16 %v655
      %v752 = vpack.c.b16 %v749, %v748
      %v753 = vpack.c.b16 %v751, %v750
      %v757 = vsel %vm696, %v743, 0
      %759 = vmatpush.bf16.msra.mxu0 0
      %760 = vmatpush.bf16.msra.mxu0 0
      %761 = vmatpush.bf16.msra.mxu0 0
      %762 = vmatpush.bf16.msra.mxu0 0
      %763 = vmatpush.bf16.msra.mxu0 0
      %764 = vmatpush.bf16.msra.mxu0 0
      %765 = vmatpush.bf16.msra.mxu0 %v753
      %766 = vmatpush.bf16.msra.mxu0 %v752
      %767 = vmatmul.bf16.gmra.mxu0 %v757
      %v768 = vpop.f32.mrf.mxu0
      %v769 = vadd.f32 0.0, %v768
      %v770 = vpop.f32.mrf.mxu0
      %v771 = vadd.f32 0.0, %v770
      %772 = vdwg.mxu0
      %v773 = vadd.f32 %v739, %v769
      %v774 = vadd.f32 %v741, %v771
      %v776 = vperm.slane %v656, 0
      %v778 = vadd.f32 %v773, %v776
      %v779 = vadd.f32 %v774, %v776
      %v780 = vmax.f32 %v778, 0.0
      %v781 = vmax.f32 %v779, 0.0
      %v782 = vpack.c.bf16 %v781, %v780
      %v784 = vperm.slane %v661, 0
      %v790 = vunpack.c.l.b16 %v657
      %v791 = vunpack.c.l.b16 %v658
      %v792 = vunpack.c.l.b16 %v659
      %v793 = vunpack.c.l.b16 %v660
      %v794 = vpack.c.b16 %v791, %v790
      %v795 = vpack.c.b16 %v793, %v792
      %v799 = vsel %vm696, %v782, 0
      %801 = vmatpush.bf16.msra.mxu0 0
      %802 = vmatpush.bf16.msra.mxu0 0
      %803 = vmatpush.bf16.msra.mxu0 0
      %804 = vmatpush.bf16.msra.mxu0 0
      %805 = vmatpush.bf16.msra.mxu0 0
      %806 = vmatpush.bf16.msra.mxu0 0
      %807 = vmatpush.bf16.msra.mxu0 %v795
      %808 = vmatpush.bf16.msra.mxu0 %v794
      %809 = vmatmul.bf16.gmra.mxu0 %v799
      %v810 = vpop.f32.mrf.mxu0
      %v811 = vadd.f32 %v784, %v810
      %v812 = vpop.f32.mrf.mxu0
      %v813 = vadd.f32 %v784, %v812
      %814 = vdwg.mxu0
      %v815 = vadd.f32 %v632, %v811
      %v816 = vadd.f32 %v634, %v813
      %v817 = vld [vmem:[%s10] sm:$0xf]
      %v818 = vld [vmem:[%s10 + $0x4] sm:$0xf]
      %v819 = vld [vmem:[%s10 + $0x8] sm:$0xf]
      %v820 = vld [vmem:[%s10 + $0xc] sm:$0xf]
      %v821 = vld [vmem:[%s11] sm:$0xf]
      %v822 = vld [vmem:[%s11 + $0x4] sm:$0xf]
      %v823 = vld [vmem:[%s11 + $0x8] sm:$0xf]
      %v824 = vld [vmem:[%s11 + $0xc] sm:$0xf]
      %v825 = vld [vmem:[%s12] sm:$0xf]
      %v826 = vld [vmem:[%s12 + $0x4] sm:$0xf]
      %v827 = vld [vmem:[%s12 + $0x8] sm:$0xf]
      %v828 = vld [vmem:[%s12 + $0xc] sm:$0xf]
      %v829 = vld [vmem:[%s13] sm:$0x1]
      %v830 = vld [vmem:[%s14] sm:$0xf]
      %v831 = vld [vmem:[%s14 + $0x4] sm:$0xf]
      %v832 = vld [vmem:[%s14 + $0x8] sm:$0xf]
      %v833 = vld [vmem:[%s14 + $0xc] sm:$0xf]
      %v834 = vld [vmem:[%s15] sm:$0x1]
      %vm835 = vcmp.ge.s32.totalorder %v640, 2
      %vm836 = vcmp.ge.s32.totalorder %v643, 2
      %v837 = vrot.slane %v815, 6
      %v838 = vrot.slane %v816, 6
      %vm839 = vcmp.lt.s32.totalorder %v667, 2
      %v840 = vsel %vm839, %v837, %v838
      %v841 = vsel %vm839, %v838, %v837
      %v842 = vsel %vm835, %v841, 0.0
      %v843 = vsel %vm836, %v840, 0.0
      %vm844 = vcmp.lt.s32.totalorder %v640, 14
      %vm845 = vcmp.lt.s32.totalorder %v643, 14
      %v846 = vrot.slane %v815, 2
      %v847 = vrot.slane %v816, 2
      %vm848 = vcmp.lt.s32.totalorder %v667, 6
      %v849 = vsel %vm848, %v846, %v847
      %v850 = vsel %vm848, %v847, %v846
      %v851 = vsel %vm844, %v849, 0.0
      %v852 = vsel %vm845, %v850, 0.0
      %v853 = vpack.c.bf16 %v816, %v815
      %v854 = vpack.c.bf16 %v843, %v842
      %v859 = vunpack.c.l.b16 %v821
      %v860 = vunpack.c.l.b16 %v822
      %v861 = vunpack.c.l.b16 %v823
      %v862 = vunpack.c.l.b16 %v824
      %v863 = vpack.c.b16 %v860, %v859
      %v864 = vpack.c.b16 %v862, %v861
      %v868 = vsel %vm696, %v853, 0
      %870 = vmatpush.bf16.msra.mxu0 0
      %871 = vmatpush.bf16.msra.mxu0 0
      %872 = vmatpush.bf16.msra.mxu0 0
      %873 = vmatpush.bf16.msra.mxu0 0
      %874 = vmatpush.bf16.msra.mxu0 0
      %875 = vmatpush.bf16.msra.mxu0 0
      %876 = vmatpush.bf16.msra.mxu0 %v864
      %877 = vmatpush.bf16.msra.mxu0 %v863
      %878 = vmatmul.bf16.gmra.mxu0 %v868
      %v879 = vpop.f32.mrf.mxu0
      %v880 = vadd.f32 0.0, %v879
      %v881 = vpop.f32.mrf.mxu0
      %v882 = vadd.f32 0.0, %v881
      %883 = vdwg.mxu0
      %v888 = vunpack.c.l.b16 %v817
      %v889 = vunpack.c.l.b16 %v818
      %v890 = vunpack.c.l.b16 %v819
      %v891 = vunpack.c.l.b16 %v820
      %v892 = vpack.c.b16 %v889, %v888
      %v893 = vpack.c.b16 %v891, %v890
      %v897 = vsel %vm696, %v854, 0
      %899 = vmatpush.bf16.msra.mxu0 0
      %900 = vmatpush.bf16.msra.mxu0 0
      %901 = vmatpush.bf16.msra.mxu0 0
      %902 = vmatpush.bf16.msra.mxu0 0
      %903 = vmatpush.bf16.msra.mxu0 0
      %904 = vmatpush.bf16.msra.mxu0 0
      %905 = vmatpush.bf16.msra.mxu0 %v893
      %906 = vmatpush.bf16.msra.mxu0 %v892
      %907 = vmatmul.bf16.gmra.mxu0 %v897
      %v908 = vpop.f32.mrf.mxu0
      %v909 = vadd.f32 %v880, %v908
      %v910 = vpop.f32.mrf.mxu0
      %v911 = vadd.f32 %v882, %v910
      %912 = vdwg.mxu0
      %v913 = vpack.c.bf16 %v852, %v851
      %v918 = vunpack.c.l.b16 %v825
      %v919 = vunpack.c.l.b16 %v826
      %v920 = vunpack.c.l.b16 %v827
      %v921 = vunpack.c.l.b16 %v828
      %v922 = vpack.c.b16 %v919, %v918
      %v923 = vpack.c.b16 %v921, %v920
      %v927 = vsel %vm696, %v913, 0
      %929 = vmatpush.bf16.msra.mxu0 0
      %930 = vmatpush.bf16.msra.mxu0 0
      %931 = vmatpush.bf16.msra.mxu0 0
      %932 = vmatpush.bf16.msra.mxu0 0
      %933 = vmatpush.bf16.msra.mxu0 0
      %934 = vmatpush.bf16.msra.mxu0 0
      %935 = vmatpush.bf16.msra.mxu0 %v923
      %936 = vmatpush.bf16.msra.mxu0 %v922
      %937 = vmatmul.bf16.gmra.mxu0 %v927
      %v938 = vpop.f32.mrf.mxu0
      %v939 = vadd.f32 0.0, %v938
      %v940 = vpop.f32.mrf.mxu0
      %v941 = vadd.f32 0.0, %v940
      %942 = vdwg.mxu0
      %v943 = vadd.f32 %v909, %v939
      %v944 = vadd.f32 %v911, %v941
      %v946 = vperm.slane %v829, 0
      %v948 = vadd.f32 %v943, %v946
      %v949 = vadd.f32 %v944, %v946
      %v950 = vmax.f32 %v948, 0.0
      %v951 = vmax.f32 %v949, 0.0
      %v952 = vpack.c.bf16 %v951, %v950
      %v954 = vperm.slane %v834, 0
      %v960 = vunpack.c.l.b16 %v830
      %v961 = vunpack.c.l.b16 %v831
      %v962 = vunpack.c.l.b16 %v832
      %v963 = vunpack.c.l.b16 %v833
      %v964 = vpack.c.b16 %v961, %v960
      %v965 = vpack.c.b16 %v963, %v962
      %v969 = vsel %vm696, %v952, 0
      %971 = vmatpush.bf16.msra.mxu0 0
      %972 = vmatpush.bf16.msra.mxu0 0
      %973 = vmatpush.bf16.msra.mxu0 0
      %974 = vmatpush.bf16.msra.mxu0 0
      %975 = vmatpush.bf16.msra.mxu0 0
      %976 = vmatpush.bf16.msra.mxu0 0
      %977 = vmatpush.bf16.msra.mxu0 %v965
      %978 = vmatpush.bf16.msra.mxu0 %v964
      %979 = vmatmul.bf16.gmra.mxu0 %v969
      %v980 = vpop.f32.mrf.mxu0
      %v981 = vadd.f32 %v954, %v980
      %v982 = vpop.f32.mrf.mxu0
      %v983 = vadd.f32 %v954, %v982
      %984 = vdwg.mxu0
      %v985 = vadd.f32 %v815, %v981
      %v986 = vadd.f32 %v816, %v983
      %v987 = vpack.c.bf16 %v986, %v985
      %v988 = vld [vmem:[%s16] sm:$0x3]
      %v989 = vld [vmem:[%s17] sm:$0x7]
      %991 = vset.pattern.permute.xlu0 0
      %992 = vperm.xlu0 %991, %v989
      %v993 = vpop.permute.xlu0 %992
      %v996 = vsel %vm696, %v988, 0
      %v999 = vsel %vm696, %v987, 0
      %1001 = vmatpush.bf16.xpose.msra.mxu0 0
      %1002 = vmatpush.bf16.xpose.msra.mxu0 0
      %1003 = vmatpush.bf16.xpose.msra.mxu0 0
      %1004 = vmatpush.bf16.xpose.msra.mxu0 0
      %1005 = vmatpush.bf16.xpose.msra.mxu0 0
      %1006 = vmatpush.bf16.xpose.msra.mxu0 0
      %1007 = vmatpush.bf16.xpose.msra.mxu0 0
      %1008 = vmatpush.bf16.xpose.msra.mxu0 %v999
      %1009 = vmatmul.bf16.gmra.mxu0 %v996
      %v1010 = vpop.f32.mrf.mxu0
      %v1011 = vadd.f32 %v993, %v1010
      %v1012 = vpop.f32.mrf.mxu0
      %1013 = vdwg.mxu0
      %vm1014 = vcmask 124928
      %1015 = vst.msk [vmem:[%s597] sm:$0x7] %vm1014, %v1011
      %p1016 = scmp.lt.s32.totalorder %s29, 1
      %s1017 = scalar_select %p1016, %s29, 1
      %s1018 = smul.addr %s1017, 4
      %s1019 = scalar_lea.vmem %s18, %s1018
      // Predicated region
      $region93: #{sstcn_forward.1} parent=91 // pred_check
        %p1020 = pneg %p435
      $region94: #{sstcn_forward.1} parent=91 // pred_check_branch
        %1022 = sbr.rel (%p1020) target = $region96
      $region95: #{sstcn_forward.1} parent=91 // pred_region
        _
      $region96: #{sstcn_forward.1} parent=91 // pred_fallthru
        _
    $region92: #{sstcn_forward.1} parent=5 // pred_fallthru
      _
    %p1023 = scmp.le.s32.totalorder 2, %s24
    // Predicated region
    $region97: #{sstcn_forward.1} parent=5 // pred_check
      %p1024 = pneg %p1023
    $region98: #{sstcn_forward.1} parent=5 // pred_check_branch
      %1026 = sbr.rel (%p1024) target = $region100
    $region99: #{sstcn_forward.1} parent=5 // pred_region
      %s1027 = ssub.s32 %s24, 2
      // Predicated region
      $region101: #{sstcn_forward.1} parent=99 // pred_check
        %p1028 = pneg %p441
      $region102: #{sstcn_forward.1} parent=99 // pred_check_branch
        %1030 = sbr.rel (%p1028) target = $region104
      $region103: #{sstcn_forward.1} parent=99 // pred_region
        %p1031 = scmp.lt.s32.totalorder %s30, 1
        %s1032 = scalar_select %p1031, %s30, 1
        %s1033 = smul.addr %s1032, 4
        %s1034 = scalar_lea.vmem %s18, %s1033
      $region104: #{sstcn_forward.1} parent=99 // pred_fallthru
        _
    $region100: #{sstcn_forward.1} parent=5 // pred_fallthru
      _
  $region6: #{sstcn_forward.1} parent=0 // loop_footer
    %s28 = sadd.s32 1, %s24
  $region7: #{sstcn_forward.1} parent=0 // loop_footer_branch
    %23 = sbr.rel target = $region3
  $region8: #{sstcn_forward.1} parent=0 // loop_exit
    _

</llo_original>
